<compile_context>
chip_gen: v7x
topology: tpu7x:2x2x1
jax: 0.10.0
libtpu: 0.0.40
codegen_flags: <defaults>
</compile_context>

<pallas_src>
import functools

import jax
import jax.numpy as jnp
from jax import lax
from jax.experimental import pallas as pl
from jax.experimental.pallas import tpu as pltpu

_SQRT2 = 1.4142135623730951


def _gelu(z, approximate):
    if approximate:
        # tanh-approx GELU: the transcendental goes to the EUP slot (frees the
        # VALU); slight deviation from PyTorch's exact erf GELU, hence a flag.
        return jax.nn.gelu(z, approximate=True)
    # PyTorch default GELU: 0.5 * z * (1 + erf(z / sqrt(2))).
    return 0.5 * z * (1.0 + lax.erf(z / _SQRT2))


def _round_up(n, m):
    return (n + m - 1) // m * m


def _maybe_pad(a, pad_width):
    # Skip the pad (and its extra HBM read+write) when already aligned.
    if all(lo == 0 and hi == 0 for lo, hi in pad_width):
        return a
    return jnp.pad(a, pad_width)


def _vmem_capacity_bytes():
    try:
        return int(pltpu.get_tpu_info().vmem_capacity_bytes)
    except Exception:
        return 64 * 1024 * 1024  # conservative default (v7x per-TC VMEM)


# --------------------------------------------------------------------------
# Kernels
# --------------------------------------------------------------------------
def _fused_reduce_kernel(gelu_approx, x_ref, w1_ref, b1_ref, w2cat_ref,
                         b2sum_ref, o_ref, g_ref):
    """All heads resident; head-sum fused into one long-K MXU matmul."""
    num_heads = x_ref.shape[0]
    dh = w1_ref.shape[-1]
    # First matmul + GELU per head (x differs per head -> cannot be fused);
    # GELU outputs land in a lane-contiguous [tb, H*dh] VMEM scratch so the
    # vreg working set stays bounded.
    for h in range(num_heads):
        z = jnp.dot(x_ref[h], w1_ref[h],
                    preferred_element_type=jnp.float32) + b1_ref[h]
        g_ref[:, h * dh:(h + 1) * dh] = _gelu(z, gelu_approx).astype(g_ref.dtype)
    # One K = H*dh MXU dot replaces H short-K matmuls + VALU accumulator adds;
    # the head accumulation happens inside the MXU.
    out = jnp.dot(g_ref[...], w2cat_ref[...],
                  preferred_element_type=jnp.float32) + b2sum_ref[...]
    o_ref[...] = out.astype(o_ref.dtype)


def _fused_stack_kernel(gelu_approx, x_ref, w1_ref, b1_ref, w2_ref, b2_ref,
                        o_ref):
    """All heads resident; per-head outputs stacked (reduce=False)."""
    num_heads = x_ref.shape[0]
    for h in range(num_heads):
        z = jnp.dot(x_ref[h], w1_ref[h],
                    preferred_element_type=jnp.float32) + b1_ref[h]
        g = _gelu(z, gelu_approx).astype(w2_ref.dtype)
        y = jnp.dot(g, w2_ref[h], preferred_element_type=jnp.float32) + b2_ref[h]
        o_ref[h] = y.astype(o_ref.dtype)


def _headtile_reduce_kernel(gelu_approx, x_ref, w1_ref, b1_ref, w2_ref,
                            b2_ref, o_ref, acc_ref):
    """VMEM fallback: one head per grid step, f32 scratch accumulator."""
    h = pl.program_id(1)

    @pl.when(h == 0)
    def _():
        acc_ref[...] = jnp.zeros_like(acc_ref)

    z = jnp.dot(x_ref[0], w1_ref[0],
                preferred_element_type=jnp.float32) + b1_ref[0]
    g = _gelu(z, gelu_approx).astype(w2_ref.dtype)
    acc_ref[...] += jnp.dot(g, w2_ref[0],
                            preferred_element_type=jnp.float32) + b2_ref[0]

    @pl.when(h == pl.num_programs(1) - 1)
    def _():
        o_ref[...] = acc_ref[...].astype(o_ref.dtype)


def _headtile_stack_kernel(gelu_approx, x_ref, w1_ref, b1_ref, w2_ref, b2_ref,
                           o_ref):
    """VMEM fallback: one head per grid step, stacked output."""
    z = jnp.dot(x_ref[0], w1_ref[0],
                preferred_element_type=jnp.float32) + b1_ref[0]
    g = _gelu(z, gelu_approx).astype(w2_ref.dtype)
    y = jnp.dot(g, w2_ref[0], preferred_element_type=jnp.float32) + b2_ref[0]
    o_ref[0] = y.astype(o_ref.dtype)


# --------------------------------------------------------------------------
# Wrapper
# --------------------------------------------------------------------------
@functools.partial(
    jax.jit,
    static_argnames=("reduce", "gelu_approx", "mxu_dtype", "force_head_tiled"))
def multiple_mlp_aligner(x, w1, b1, w2, b2, *, reduce=True, gelu_approx=False,
                         mxu_dtype=None, force_head_tiled=False):
    """x: [H, B, Dm]; w1: [H, Dm, Dh]; b1: [H, Dh]; w2: [H, Dh, Dc]; b2: [H, Dc].

    Weights are laid out for `x @ W` (PyTorch's Linear weight pre-transposed).
    Returns [B, Dc] if reduce else [H, B, Dc].
    """
    H, B, Dm = x.shape
    Dh = w1.shape[-1]
    Dc = w2.shape[-1]
    out_dtype = x.dtype

    # Lane-dense / MXU-aligned padding (zero padding is numerically inert).
    dm_p = _round_up(Dm, 128)
    dh_p = _round_up(Dh, 128)
    dc_p = _round_up(Dc, 128)

    # Batch tile: sublane aligned, and aim for >=2 grid steps so the parallel
    # batch axis can be sharded across both TensorCores on v7x.
    if B <= 8:
        tb = _round_up(max(B, 1), 8)
    elif B >= 512:
        tb = 256
    else:
        tb = _round_up((B + 1) // 2, 8)
    b_p = _round_up(B, tb)
    n_btiles = b_p // tb

    # TODO(synk): in a real deployment, pre-pad/reshape/cast the parameters
    # once at init time instead of on every forward call.
    xp = _maybe_pad(x, ((0, 0), (0, b_p - B), (0, dm_p - Dm)))
    w1p = _maybe_pad(w1, ((0, 0), (0, dm_p - Dm), (0, dh_p - Dh)))
    w2p = _maybe_pad(w2, ((0, 0), (0, dh_p - Dh), (0, dc_p - Dc)))
    b1p = _maybe_pad(b1.reshape(H, 1, Dh),
                     ((0, 0), (0, 0), (0, dh_p - Dh))).astype(jnp.float32)
    b2p = _maybe_pad(b2.reshape(H, 1, Dc),
                     ((0, 0), (0, 0), (0, dc_p - Dc))).astype(jnp.float32)

    if mxu_dtype is not None:
        # Optional reduced-precision MXU operands (e.g. jnp.bfloat16 on
        # v6e/v7x): halves weight DMA/VMEM; accumulation stays f32.
        xp = xp.astype(mxu_dtype)
        w1p = w1p.astype(mxu_dtype)
        w2p = w2p.astype(mxu_dtype)

    w_isz = jnp.dtype(w1p.dtype).itemsize
    x_isz = jnp.dtype(xp.dtype).itemsize
    o_isz = jnp.dtype(out_dtype).itemsize

    # Per-generation VMEM budget.
    vmem_cap = _vmem_capacity_bytes()
    vmem_limit = max(32 * 1024 * 1024,
                     min(vmem_cap * 3 // 4, 96 * 1024 * 1024))

    # Static VMEM estimate for the fused (all-heads-resident) path:
    # single-buffered weight stacks + double-buffered x / out tiles + scratch.
    resident_bytes = (H * dm_p * dh_p + H * dh_p * dc_p) * w_isz \
        + H * (dh_p + dc_p) * 4
    out_heads = 1 if reduce else H
    per_step_bytes = (2 * H * tb * dm_p * x_isz
                      + (tb * H * dh_p * w_isz if reduce else 0)
                      + 2 * out_heads * tb * dc_p * o_isz)
    fused_ok = (not force_head_tiled) and \
        (resident_bytes + per_step_bytes <= int(0.7 * vmem_limit))

    # Advisory cost estimate (padded dims).
    out_elems = out_heads * b_p * dc_p
    cost = pl.CostEstimate(
        flops=2 * H * b_p * (dm_p * dh_p + dh_p * dc_p),
        transcendentals=H * b_p * dh_p,
        bytes_accessed=(xp.size * x_isz + (w1p.size + w2p.size) * w_isz
                        + (b1p.size + b2p.size) * 4 + out_elems * o_isz),
    )

    if fused_ok:
        # Resident weight/bias specs: constant index_map -> single buffer.
        w1_spec = pl.BlockSpec((H, dm_p, dh_p), lambda i: (0, 0, 0),
                               pipeline_mode=pl.Buffered(1))
        b1_spec = pl.BlockSpec((H, 1, dh_p), lambda i: (0, 0, 0),
                               pipeline_mode=pl.Buffered(1))
        x_spec = pl.BlockSpec((H, tb, dm_p), lambda i: (0, i, 0))
        compiler_params = pltpu.CompilerParams(
            dimension_semantics=("parallel",),
            vmem_limit_bytes=vmem_limit)

        if reduce:
            # Fuse the H second matmuls + head-sum into one long-K matmul.
            w2cat = w2p.reshape(H * dh_p, dc_p)
            b2sum = jnp.sum(b2p, axis=0)  # [1, dc_p]
            out = pl.pallas_call(
                functools.partial(_fused_reduce_kernel, gelu_approx),
                out_shape=jax.ShapeDtypeStruct((b_p, dc_p), out_dtype),
                grid_spec=pltpu.PrefetchScalarGridSpec(
                    num_scalar_prefetch=0,
                    grid=(n_btiles,),
                    in_specs=[
                        x_spec,
                        w1_spec,
                        b1_spec,
                        pl.BlockSpec((H * dh_p, dc_p), lambda i: (0, 0),
                                     pipeline_mode=pl.Buffered(1)),
                        pl.BlockSpec((1, dc_p), lambda i: (0, 0),
                                     pipeline_mode=pl.Buffered(1)),
                    ],
                    out_specs=pl.BlockSpec((tb, dc_p), lambda i: (i, 0)),
                    scratch_shapes=[pltpu.VMEM((tb, H * dh_p), w2p.dtype)],
                ),
                compiler_params=compiler_params,
                cost_estimate=cost,
            )(xp, w1p, b1p, w2cat, b2sum)
            return out[:B, :Dc]

        out = pl.pallas_call(
            functools.partial(_fused_stack_kernel, gelu_approx),
            out_shape=jax.ShapeDtypeStruct((H, b_p, dc_p), out_dtype),
            grid_spec=pltpu.PrefetchScalarGridSpec(
                num_scalar_prefetch=0,
                grid=(n_btiles,),
                in_specs=[
                    x_spec,
                    w1_spec,
                    b1_spec,
                    pl.BlockSpec((H, dh_p, dc_p), lambda i: (0, 0, 0),
                                 pipeline_mode=pl.Buffered(1)),
                    pl.BlockSpec((H, 1, dc_p), lambda i: (0, 0, 0),
                                 pipeline_mode=pl.Buffered(1)),
                ],
                out_specs=pl.BlockSpec((H, tb, dc_p), lambda i: (0, i, 0)),
            ),
            compiler_params=compiler_params,
            cost_estimate=cost,
        )(xp, w1p, b1p, w2p, b2p)
        return out[:, :B, :Dc]

    # ---------------- Head-tiled fallback (weights too big for VMEM) --------
    in_specs = [
        pl.BlockSpec((1, tb, dm_p), lambda i, h: (h, i, 0)),
        pl.BlockSpec((1, dm_p, dh_p), lambda i, h: (h, 0, 0)),
        pl.BlockSpec((1, 1, dh_p), lambda i, h: (h, 0, 0)),
        pl.BlockSpec((1, dh_p, dc_p), lambda i, h: (h, 0, 0)),
        pl.BlockSpec((1, 1, dc_p), lambda i, h: (h, 0, 0)),
    ]

    if reduce:
        out = pl.pallas_call(
            functools.partial(_headtile_reduce_kernel, gelu_approx),
            out_shape=jax.ShapeDtypeStruct((b_p, dc_p), out_dtype),
            grid_spec=pltpu.PrefetchScalarGridSpec(
                num_scalar_prefetch=0,
                grid=(n_btiles, H),
                in_specs=in_specs,
                out_specs=pl.BlockSpec((tb, dc_p), lambda i, h: (i, 0)),
                scratch_shapes=[pltpu.VMEM((tb, dc_p), jnp.float32)],
            ),
            compiler_params=pltpu.CompilerParams(
                dimension_semantics=("parallel", "arbitrary"),
                vmem_limit_bytes=vmem_limit),
            cost_estimate=cost,
        )(xp, w1p, b1p, w2p, b2p)
        return out[:B, :Dc]

    out = pl.pallas_call(
        functools.partial(_headtile_stack_kernel, gelu_approx),
        out_shape=jax.ShapeDtypeStruct((H, b_p, dc_p), out_dtype),
        grid_spec=pltpu.PrefetchScalarGridSpec(
            num_scalar_prefetch=0,
            grid=(n_btiles, H),
            in_specs=in_specs,
            out_specs=pl.BlockSpec((1, tb, dc_p), lambda i, h: (h, i, 0)),
        ),
        compiler_params=pltpu.CompilerParams(
            dimension_semantics=("parallel", "parallel"),
            vmem_limit_bytes=vmem_limit),
        cost_estimate=cost,
    )(xp, w1p, b1p, w2p, b2p)
    return out[:, :B, :Dc]


# --------------------------------------------------------------------------
# Reference + self-test
# --------------------------------------------------------------------------
def _reference(x, w1, b1, w2, b2, reduce=True):
    z = jnp.einsum("hbm,hmk->hbk", x, w1) + b1[:, None, :]
    g = 0.5 * z * (1.0 + lax.erf(z / _SQRT2))
    y = jnp.einsum("hbk,hkc->hbc", g, w2) + b2[:, None, :]
    return y.sum(0) if reduce else y


if __name__ == "__main__":
    # Small shapes consistent with the module.
    num_heads, batch = 2, 8
    model_dim, hidden_dim, clip_dim = 32, 64, 32

    key = jax.random.PRNGKey(0)
    kx, k1, k2, k3, k4, kx2 = jax.random.split(key, 6)

    x = jax.random.normal(kx, (num_heads, batch, model_dim), jnp.float32)
    w1 = jax.random.normal(k1, (num_heads, model_dim, hidden_dim),
                           jnp.float32) * (1.0 / jnp.sqrt(model_dim))
    b1 = jax.random.normal(k2, (num_heads, hidden_dim), jnp.float32) * 0.01
    w2 = jax.random.normal(k3, (num_heads, hidden_dim, clip_dim),
                           jnp.float32) * (1.0 / jnp.sqrt(hidden_dim))
    b2 = jax.random.normal(k4, (num_heads, clip_dim), jnp.float32) * 0.01

    # Fused (weights-resident) paths.
    out = jax.block_until_ready(
        multiple_mlp_aligner(x, w1, b1, w2, b2, reduce=True))
    ref = _reference(x, w1, b1, w2, b2, reduce=True)
    assert out.shape == (batch, clip_dim)
    assert jnp.allclose(out, ref, atol=1e-4, rtol=1e-4)

    out_s = jax.block_until_ready(
        multiple_mlp_aligner(x, w1, b1, w2, b2, reduce=False))
    ref_s = _reference(x, w1, b1, w2, b2, reduce=False)
    assert out_s.shape == (num_heads, batch, clip_dim)
    assert jnp.allclose(out_s, ref_s, atol=1e-4, rtol=1e-4)

    # Head-tiled fallback paths (used when the weight stacks would not fit the
    # per-generation VMEM budget), exercised explicitly here for coverage.
    out_ht = jax.block_until_ready(
        multiple_mlp_aligner(x, w1, b1, w2, b2, reduce=True,
                             force_head_tiled=True))
    assert jnp.allclose(out_ht, ref, atol=1e-4, rtol=1e-4)

    out_hts = jax.block_until_ready(
        multiple_mlp_aligner(x, w1, b1, w2, b2, reduce=False,
                             force_head_tiled=True))
    assert jnp.allclose(out_hts, ref_s, atol=1e-4, rtol=1e-4)

    # Unaligned batch -> zero padding + >=2 batch grid steps.
    x12 = jax.random.normal(kx2, (num_heads, 12, model_dim), jnp.float32)
    out12 = jax.block_until_ready(
        multiple_mlp_aligner(x12, w1, b1, w2, b2, reduce=True))
    ref12 = _reference(x12, w1, b1, w2, b2, reduce=True)
    assert out12.shape == (12, clip_dim)
    assert jnp.allclose(out12, ref12, atol=1e-4, rtol=1e-4)

    print("KERNEL_OK")
</pallas_src>

<mosaic_0001>
module attributes {stable_mosaic.version = 11 : i64} {
  func.func @_fused_reduce_kernel(%arg0: i32, %arg1: memref<2x8x128xf32, #tpu.memory_space<vmem>>, %arg2: memref<2x128x128xf32, #tpu.memory_space<vmem>>, %arg3: memref<2x1x128xf32, #tpu.memory_space<vmem>>, %arg4: memref<256x128xf32, #tpu.memory_space<vmem>>, %arg5: memref<1x128xf32, #tpu.memory_space<vmem>>, %arg6: memref<8x128xf32, #tpu.memory_space<vmem>>, %arg7: memref<8x256xf32, #tpu.memory_space<vmem>>) attributes {dimension_semantics = [#tpu.dimension_semantics<parallel>], iteration_bounds = array<i64: 1>, scalar_prefetch = 0 : i64, scratch_operands = 1 : i64, tpu.core_type = #tpu.core_type<tc>, window_params = [{transform_indices = @transform_0, window_bounds = array<i64: 2, 8, 128>}, {pipeline_mode = #tpu.pipeline_mode<synchronous>, transform_indices = @transform_1, window_bounds = array<i64: 2, 128, 128>}, {pipeline_mode = #tpu.pipeline_mode<synchronous>, transform_indices = @transform_2, window_bounds = array<i64: 2, 1, 128>}, {pipeline_mode = #tpu.pipeline_mode<synchronous>, transform_indices = @transform_3, window_bounds = array<i64: 256, 128>}, {pipeline_mode = #tpu.pipeline_mode<synchronous>, transform_indices = @transform_4, window_bounds = array<i64: 1, 128>}, {transform_indices = @transform_5, window_bounds = array<i64: 8, 128>}]} {
    %c0 = arith.constant 0 : index
    %c0_0 = arith.constant 0 : index
    %c0_1 = arith.constant 0 : index
    %0 = vector.load %arg1[%c0, %c0_0, %c0_1] : memref<2x8x128xf32, #tpu.memory_space<vmem>>, vector<1x8x128xf32>
    %1 = vector.shape_cast %0 : vector<1x8x128xf32> to vector<8x128xf32>
    %c0_2 = arith.constant 0 : index
    %c0_3 = arith.constant 0 : index
    %c0_4 = arith.constant 0 : index
    %2 = vector.load %arg2[%c0_2, %c0_3, %c0_4] : memref<2x128x128xf32, #tpu.memory_space<vmem>>, vector<1x128x128xf32>
    %3 = vector.shape_cast %2 : vector<1x128x128xf32> to vector<128x128xf32>
    %cst = arith.constant dense<0.000000e+00> : vector<8x128xf32>
    %4 = tpu.matmul %1, %3, %cst {dimension_numbers = #tpu.dot_dimension_numbers<[1], [0], [0], [1], [0, 0, 1, 1], [], []>} : vector<8x128xf32>, vector<128x128xf32>, vector<8x128xf32> -> vector<8x128xf32>
    %c0_5 = arith.constant 0 : index
    %c0_6 = arith.constant 0 : index
    %c0_7 = arith.constant 0 : index
    %5 = vector.load %arg3[%c0_5, %c0_6, %c0_7] : memref<2x1x128xf32, #tpu.memory_space<vmem>>, vector<1x1x128xf32>
    %6 = vector.shape_cast %5 : vector<1x1x128xf32> to vector<1x128xf32>
    %7 = vector.broadcast %6 : vector<1x128xf32> to vector<8x128xf32>
    %8 = arith.addf %4, %7 : vector<8x128xf32>
    %cst_8 = arith.constant 5.000000e-01 : f32
    %9 = vector.broadcast %cst_8 : f32 to vector<8x128xf32>
    %10 = arith.mulf %9, %8 : vector<8x128xf32>
    %cst_9 = arith.constant 1.41421354 : f32
    %11 = vector.broadcast %cst_9 : f32 to vector<8x128xf32>
    %12 = arith.divf %8, %11 : vector<8x128xf32>
    %13 = math.erf %12 : vector<8x128xf32>
    %cst_10 = arith.constant 1.000000e+00 : f32
    %14 = vector.broadcast %cst_10 : f32 to vector<8x128xf32>
    %15 = arith.addf %14, %13 : vector<8x128xf32>
    %16 = arith.mulf %10, %15 : vector<8x128xf32>
    %c0_11 = arith.constant 0 : index
    %c0_12 = arith.constant 0 : index
    %17 = vector.load %arg7[%c0_11, %c0_12] : memref<8x256xf32, #tpu.memory_space<vmem>>, vector<8x128xf32>
    tpu.vector_store %arg7[%c0_11, %c0_12], %16 {strides = array<i32>} : memref<8x256xf32, #tpu.memory_space<vmem>>, vector<8x128xf32>,
    %c1 = arith.constant 1 : index
    %c0_13 = arith.constant 0 : index
    %c0_14 = arith.constant 0 : index
    %18 = vector.load %arg1[%c1, %c0_13, %c0_14] : memref<2x8x128xf32, #tpu.memory_space<vmem>>, vector<1x8x128xf32>
    %19 = vector.shape_cast %18 : vector<1x8x128xf32> to vector<8x128xf32>
    %c1_15 = arith.constant 1 : index
    %c0_16 = arith.constant 0 : index
    %c0_17 = arith.constant 0 : index
    %20 = vector.load %arg2[%c1_15, %c0_16, %c0_17] : memref<2x128x128xf32, #tpu.memory_space<vmem>>, vector<1x128x128xf32>
    %21 = vector.shape_cast %20 : vector<1x128x128xf32> to vector<128x128xf32>
    %cst_18 = arith.constant dense<0.000000e+00> : vector<8x128xf32>
    %22 = tpu.matmul %19, %21, %cst_18 {dimension_numbers = #tpu.dot_dimension_numbers<[1], [0], [0], [1], [0, 0, 1, 1], [], []>} : vector<8x128xf32>, vector<128x128xf32>, vector<8x128xf32> -> vector<8x128xf32>
    %c1_19 = arith.constant 1 : index
    %c0_20 = arith.constant 0 : index
    %c0_21 = arith.constant 0 : index
    %23 = vector.load %arg3[%c1_19, %c0_20, %c0_21] : memref<2x1x128xf32, #tpu.memory_space<vmem>>, vector<1x1x128xf32>
    %24 = vector.shape_cast %23 : vector<1x1x128xf32> to vector<1x128xf32>
    %25 = vector.broadcast %24 : vector<1x128xf32> to vector<8x128xf32>
    %26 = arith.addf %22, %25 : vector<8x128xf32>
    %cst_22 = arith.constant 5.000000e-01 : f32
    %27 = vector.broadcast %cst_22 : f32 to vector<8x128xf32>
    %28 = arith.mulf %27, %26 : vector<8x128xf32>
    %cst_23 = arith.constant 1.41421354 : f32
    %29 = vector.broadcast %cst_23 : f32 to vector<8x128xf32>
    %30 = arith.divf %26, %29 : vector<8x128xf32>
    %31 = math.erf %30 : vector<8x128xf32>
    %cst_24 = arith.constant 1.000000e+00 : f32
    %32 = vector.broadcast %cst_24 : f32 to vector<8x128xf32>
    %33 = arith.addf %32, %31 : vector<8x128xf32>
    %34 = arith.mulf %28, %33 : vector<8x128xf32>
    %c0_25 = arith.constant 0 : index
    %c128 = arith.constant 128 : index
    %35 = vector.load %arg7[%c0_25, %c128] : memref<8x256xf32, #tpu.memory_space<vmem>>, vector<8x128xf32>
    tpu.vector_store %arg7[%c0_25, %c128], %34 {strides = array<i32>} : memref<8x256xf32, #tpu.memory_space<vmem>>, vector<8x128xf32>,
    %c0_26 = arith.constant 0 : index
    %c0_27 = arith.constant 0 : index
    %36 = vector.load %arg7[%c0_26, %c0_27] : memref<8x256xf32, #tpu.memory_space<vmem>>, vector<8x256xf32>
    %c0_28 = arith.constant 0 : index
    %c0_29 = arith.constant 0 : index
    %37 = vector.load %arg4[%c0_28, %c0_29] : memref<256x128xf32, #tpu.memory_space<vmem>>, vector<256x128xf32>
    %cst_30 = arith.constant dense<0.000000e+00> : vector<8x128xf32>
    %38 = tpu.matmul %36, %37, %cst_30 {dimension_numbers = #tpu.dot_dimension_numbers<[1], [0], [0], [1], [0, 0, 1, 1], [], []>} : vector<8x256xf32>, vector<256x128xf32>, vector<8x128xf32> -> vector<8x128xf32>
    %c0_31 = arith.constant 0 : index
    %c0_32 = arith.constant 0 : index
    %39 = vector.load %arg5[%c0_31, %c0_32] : memref<1x128xf32, #tpu.memory_space<vmem>>, vector<1x128xf32>
    %40 = vector.broadcast %39 : vector<1x128xf32> to vector<8x128xf32>
    %41 = arith.addf %38, %40 : vector<8x128xf32>
    %c0_33 = arith.constant 0 : index
    %c0_34 = arith.constant 0 : index
    %42 = vector.load %arg6[%c0_33, %c0_34] : memref<8x128xf32, #tpu.memory_space<vmem>>, vector<8x128xf32>
    tpu.vector_store %arg6[%c0_33, %c0_34], %41 {strides = array<i32>} : memref<8x128xf32, #tpu.memory_space<vmem>>, vector<8x128xf32>,
    return
  }
  func.func @transform_0(%arg0: i32) -> (i32, i32, i32) {
    %c0_i32 = arith.constant 0 : i32
    %c0_i32_0 = arith.constant 0 : i32
    %c0_i32_1 = arith.constant 0 : i32
    return %c0_i32, %arg0, %c0_i32_0 : i32, i32, i32
  }
  func.func @transform_1(%arg0: i32) -> (i32, i32, i32) {
    %c0_i32 = arith.constant 0 : i32
    %c0_i32_0 = arith.constant 0 : i32
    %c0_i32_1 = arith.constant 0 : i32
    %c0_i32_2 = arith.constant 0 : i32
    return %c0_i32, %c0_i32_0, %c0_i32_1 : i32, i32, i32
  }
  func.func @transform_2(%arg0: i32) -> (i32, i32, i32) {
    %c0_i32 = arith.constant 0 : i32
    %c0_i32_0 = arith.constant 0 : i32
    %c0_i32_1 = arith.constant 0 : i32
    %c0_i32_2 = arith.constant 0 : i32
    return %c0_i32, %c0_i32_0, %c0_i32_1 : i32, i32, i32
  }
  func.func @transform_3(%arg0: i32) -> (i32, i32) {
    %c0_i32 = arith.constant 0 : i32
    %c0_i32_0 = arith.constant 0 : i32
    %c0_i32_1 = arith.constant 0 : i32
    return %c0_i32, %c0_i32_0 : i32, i32
  }
  func.func @transform_4(%arg0: i32) -> (i32, i32) {
    %c0_i32 = arith.constant 0 : i32
    %c0_i32_0 = arith.constant 0 : i32
    %c0_i32_1 = arith.constant 0 : i32
    return %c0_i32, %c0_i32_0 : i32, i32
  }
  func.func @transform_5(%arg0: i32) -> (i32, i32) {
    %c0_i32 = arith.constant 0 : i32
    %c0_i32_0 = arith.constant 0 : i32
    return %arg0, %c0_i32 : i32, i32
  }
}

</mosaic_0001>

<llo_original>
// kernel: multiple_mlp_aligner.1
$region0: #{multiple_mlp_aligner.1}
  #allocation0 [shape = 'u32[]', space=smem, size = 0x4, offset = 0x4, fixed_abs, tag = 'smem constant byte address 0x4 - core index']
  #allocation1 [shape = 'u32[144,128]{1,0:T(1,128)}', space=vmem, size = 0x12000, scoped, tag = 'internal scratch']
  #allocation2 [shape = 'f32[8,256]{1,0:T(8,128)}', space=vmem, size = 0x2000, scoped, tag = 'scratch operand']
  %s0 = inlined_call_operand.vmem [shape: f32[2,8,128], index: 0, kind: input, shape index: {}]
  %s1 = inlined_call_operand.vmem [shape: f32[2,128,128], index: 1, kind: input, shape index: {}]
  %s2 = inlined_call_operand.vmem [shape: f32[2,1,128], index: 2, kind: input, shape index: {}]
  %s3 = inlined_call_operand.vmem [shape: f32[256,128], index: 3, kind: input, shape index: {}]
  %s4 = inlined_call_operand.vmem [shape: f32[1,128], index: 4, kind: input, shape index: {}]
  %s5 = inlined_call_operand.hbm [shape: f32[8,128], index: 5, kind: output, shape index: {}]
  %s6 = sld [smem:[#allocation0]]
  $region30: #{multiple_mlp_aligner.1} parent=0
    _
  %s8 = ssub.s32 1, %s6
  %s9 = scalar_select 0, %s8, %s6
  $region1: #{multiple_mlp_aligner.1} parent=0
    #allocation3 [shape = 'u8[4096]{0}', space=vmem, size = 0x1000, scoped, tag = 'output window, operand 0, single buffered']
    #allocation4 [shape = 's32[1]{0}', space=sflag, size = 0x4, scoped, tag = 'scoped memory for multiple_mlp_aligner.1']
    %10 = vsyncpa [#allocation4], 0
    // Predicated region
    $region2: #{multiple_mlp_aligner.1} parent=1 // pred_check
      _
    $region3: #{multiple_mlp_aligner.1} parent=1 // pred_check_branch
      %12 = sbr.rel (0) target = $region5
    $region4: #{multiple_mlp_aligner.1} parent=1 // pred_region
      _
    $region5: #{multiple_mlp_aligner.1} parent=1 // pred_fallthru
      _
    // Predicated region
    $region6: #{multiple_mlp_aligner.1} parent=1 // pred_check
      _
    $region7: #{multiple_mlp_aligner.1} parent=1 // pred_check_branch
      %14 = sbr.rel (0) target = $region9
    $region8: #{multiple_mlp_aligner.1} parent=1 // pred_region
      _
    $region9: #{multiple_mlp_aligner.1} parent=1 // pred_fallthru
      _
    // Predicated region
    $region10: #{multiple_mlp_aligner.1} parent=1 // pred_check
      _
    $region11: #{multiple_mlp_aligner.1} parent=1 // pred_check_branch
      %16 = sbr.rel (0) target = $region13
    $region12: #{multiple_mlp_aligner.1} parent=1 // pred_region
      _
    $region13: #{multiple_mlp_aligner.1} parent=1 // pred_fallthru
      _
    // Predicated region
    $region14: #{multiple_mlp_aligner.1} parent=1 // pred_check
      _
    $region15: #{multiple_mlp_aligner.1} parent=1 // pred_check_branch
      %18 = sbr.rel (0) target = $region17
    $region16: #{multiple_mlp_aligner.1} parent=1 // pred_region
      _
    $region17: #{multiple_mlp_aligner.1} parent=1 // pred_fallthru
      _
    // Predicated region
    $region18: #{multiple_mlp_aligner.1} parent=1 // pred_check
      _
    $region19: #{multiple_mlp_aligner.1} parent=1 // pred_check_branch
      %20 = sbr.rel (0) target = $region21
    $region20: #{multiple_mlp_aligner.1} parent=1 // pred_region
      _
    $region21: #{multiple_mlp_aligner.1} parent=1 // pred_fallthru
      _
    %v21 = vld [vmem:[%s0] sm:$0xff]
    %v22 = vld [vmem:[%s1] sm:$0xff]
    %v23 = vld [vmem:[%s1 + $0x8] sm:$0xff]
    %v24 = vld [vmem:[%s1 + $0x10] sm:$0xff]
    %v25 = vld [vmem:[%s1 + $0x18] sm:$0xff]
    %v26 = vld [vmem:[%s1 + $0x20] sm:$0xff]
    %v27 = vld [vmem:[%s1 + $0x28] sm:$0xff]
    %v28 = vld [vmem:[%s1 + $0x30] sm:$0xff]
    %v29 = vld [vmem:[%s1 + $0x38] sm:$0xff]
    %v30 = vld [vmem:[%s1 + $0x40] sm:$0xff]
    %v31 = vld [vmem:[%s1 + $0x48] sm:$0xff]
    %v32 = vld [vmem:[%s1 + $0x50] sm:$0xff]
    %v33 = vld [vmem:[%s1 + $0x58] sm:$0xff]
    %v34 = vld [vmem:[%s1 + $0x60] sm:$0xff]
    %v35 = vld [vmem:[%s1 + $0x68] sm:$0xff]
    %v36 = vld [vmem:[%s1 + $0x70] sm:$0xff]
    %v37 = vld [vmem:[%s1 + $0x78] sm:$0xff]
    %v38 = vld [vmem:[%s2] sm:$0x1]
    %v40 = vlaneseq
    %v41 = vshrl.u32 %v40, 7
    %v42 = vsub.s32 0, %v41
    %v43 = vrot.slane %v38, %v42
    %45 = vmatprep.subr.mxu0 0.0
    %46 = vmatpush1.msra.mxu0 %v22
    %47 = vmatprep.subr.mxu0 0.0
    %48 = vmatpush1.msra.mxu0 %v23
    %49 = vmatprep.subr.mxu0 0.0
    %50 = vmatpush1.msra.mxu0 %v24
    %51 = vmatprep.subr.mxu0 0.0
    %52 = vmatpush1.msra.mxu0 %v25
    %53 = vmatprep.subr.mxu0 0.0
    %54 = vmatpush1.msra.mxu0 %v26
    %55 = vmatprep.subr.mxu0 0.0
    %56 = vmatpush1.msra.mxu0 %v27
    %57 = vmatprep.subr.mxu0 0.0
    %58 = vmatpush1.msra.mxu0 %v28
    %59 = vmatprep.subr.mxu0 0.0
    %60 = vmatpush1.msra.mxu0 %v29
    %61 = vmatprep.subr.mxu0 0.0
    %62 = vmatpush1.msra.mxu0 %v30
    %63 = vmatprep.subr.mxu0 0.0
    %64 = vmatpush1.msra.mxu0 %v31
    %65 = vmatprep.subr.mxu0 0.0
    %66 = vmatpush1.msra.mxu0 %v32
    %67 = vmatprep.subr.mxu0 0.0
    %68 = vmatpush1.msra.mxu0 %v33
    %69 = vmatprep.subr.mxu0 0.0
    %70 = vmatpush1.msra.mxu0 %v34
    %71 = vmatprep.subr.mxu0 0.0
    %72 = vmatpush1.msra.mxu0 %v35
    %73 = vmatprep.subr.mxu0 0.0
    %74 = vmatpush1.msra.mxu0 %v36
    %75 = vmatprep.subr.mxu0 0.0
    %76 = vmatpush1.msra.mxu0 %v37
    %77 = vmatprep.subr.mxu0 0.0
    %78 = vmatpush1.msra.mxu0 0.0
    %79 = vmatprep.subr.mxu0 0.0
    %80 = vmatpush1.msra.mxu0 0.0
    %81 = vmatprep.subr.mxu0 0.0
    %82 = vmatpush1.msra.mxu0 0.0
    %83 = vmatprep.subr.mxu0 0.0
    %84 = vmatpush1.msra.mxu0 0.0
    %85 = vmatprep.subr.mxu0 0.0
    %86 = vmatpush1.msra.mxu0 0.0
    %87 = vmatprep.subr.mxu0 0.0
    %88 = vmatpush1.msra.mxu0 0.0
    %89 = vmatprep.subr.mxu0 0.0
    %90 = vmatpush1.msra.mxu0 0.0
    %91 = vmatprep.subr.mxu0 0.0
    %92 = vmatpush1.msra.mxu0 0.0
    %93 = vmatprep.subr.mxu0 0.0
    %94 = vmatpush1.msra.mxu0 0.0
    %95 = vmatprep.subr.mxu0 0.0
    %96 = vmatpush1.msra.mxu0 0.0
    %97 = vmatprep.subr.mxu0 0.0
    %98 = vmatpush1.msra.mxu0 0.0
    %99 = vmatprep.subr.mxu0 0.0
    %100 = vmatpush1.msra.mxu0 0.0
    %101 = vmatprep.subr.mxu0 0.0
    %102 = vmatpush1.msra.mxu0 0.0
    %103 = vmatprep.subr.mxu0 0.0
    %104 = vmatpush1.msra.mxu0 0.0
    %105 = vmatprep.subr.mxu0 0.0
    %106 = vmatpush1.msra.mxu0 0.0
    %107 = vmatprep.subr.mxu0 0.0
    %108 = vmatpush1.msra.mxu0 0.0
    %109 = vmatprep.mubr.f32.mxu0 0.0
    %110 = vmatmul.mubr.f32.gmra.mrb[0].mxu0 %v21
    %v111 = vpop.f32.mrb[0].mxu0
    %v112 = vadd.f32 %v43, %v111
    %v113 = vpop.f32.mrb[0].mxu0
    %114 = vdwg.mxu0
    %v115 = vmul.f32 %v112, 0.5
    %v116 = vrcp.pop 1.4142135
    %v117 = vmul.f32 %v112, %v116
    %v118 = verf.f32.pop %v117
    %v119 = vadd.f32 %v118, 1.0
    %v120 = vmul.f32 %v115, %v119
    %121 = vst [vmem:[#allocation2] sm:$0xff] %v120
    %s122 = scalar_lea.vmem %s0, 8
    %v123 = vld [vmem:[%s122] sm:$0xff]
    %s124 = scalar_lea.vmem %s1, 128
    %v125 = vld [vmem:[%s124] sm:$0xff]
    %v126 = vld [vmem:[%s124 + $0x8] sm:$0xff]
    %v127 = vld [vmem:[%s124 + $0x10] sm:$0xff]
    %v128 = vld [vmem:[%s124 + $0x18] sm:$0xff]
    %v129 = vld [vmem:[%s124 + $0x20] sm:$0xff]
    %v130 = vld [vmem:[%s124 + $0x28] sm:$0xff]
    %v131 = vld [vmem:[%s124 + $0x30] sm:$0xff]
    %v132 = vld [vmem:[%s124 + $0x38] sm:$0xff]
    %v133 = vld [vmem:[%s124 + $0x40] sm:$0xff]
    %v134 = vld [vmem:[%s124 + $0x48] sm:$0xff]
    %v135 = vld [vmem:[%s124 + $0x50] sm:$0xff]
    %v136 = vld [vmem:[%s124 + $0x58] sm:$0xff]
    %v137 = vld [vmem:[%s124 + $0x60] sm:$0xff]
    %v138 = vld [vmem:[%s124 + $0x68] sm:$0xff]
    %v139 = vld [vmem:[%s124 + $0x70] sm:$0xff]
    %v140 = vld [vmem:[%s124 + $0x78] sm:$0xff]
    %s141 = scalar_lea.vmem %s2, 1
    %v142 = vld [vmem:[%s141] sm:$0x1]
    %v144 = vlaneseq
    %v145 = vshrl.u32 %v144, 7
    %v146 = vsub.s32 0, %v145
    %v147 = vrot.slane %v142, %v146
    %149 = vmatprep.subr.mxu0 0.0
    %150 = vmatpush1.msra.mxu0 %v125
    %151 = vmatprep.subr.mxu0 0.0
    %152 = vmatpush1.msra.mxu0 %v126
    %153 = vmatprep.subr.mxu0 0.0
    %154 = vmatpush1.msra.mxu0 %v127
    %155 = vmatprep.subr.mxu0 0.0
    %156 = vmatpush1.msra.mxu0 %v128
    %157 = vmatprep.subr.mxu0 0.0
    %158 = vmatpush1.msra.mxu0 %v129
    %159 = vmatprep.subr.mxu0 0.0
    %160 = vmatpush1.msra.mxu0 %v130
    %161 = vmatprep.subr.mxu0 0.0
    %162 = vmatpush1.msra.mxu0 %v131
    %163 = vmatprep.subr.mxu0 0.0
    %164 = vmatpush1.msra.mxu0 %v132
    %165 = vmatprep.subr.mxu0 0.0
    %166 = vmatpush1.msra.mxu0 %v133
    %167 = vmatprep.subr.mxu0 0.0
    %168 = vmatpush1.msra.mxu0 %v134
    %169 = vmatprep.subr.mxu0 0.0
    %170 = vmatpush1.msra.mxu0 %v135
    %171 = vmatprep.subr.mxu0 0.0
    %172 = vmatpush1.msra.mxu0 %v136
    %173 = vmatprep.subr.mxu0 0.0
    %174 = vmatpush1.msra.mxu0 %v137
    %175 = vmatprep.subr.mxu0 0.0
    %176 = vmatpush1.msra.mxu0 %v138
    %177 = vmatprep.subr.mxu0 0.0
    %178 = vmatpush1.msra.mxu0 %v139
    %179 = vmatprep.subr.mxu0 0.0
    %180 = vmatpush1.msra.mxu0 %v140
    %181 = vmatprep.subr.mxu0 0.0
    %182 = vmatpush1.msra.mxu0 0.0
    %183 = vmatprep.subr.mxu0 0.0
    %184 = vmatpush1.msra.mxu0 0.0
    %185 = vmatprep.subr.mxu0 0.0
    %186 = vmatpush1.msra.mxu0 0.0
    %187 = vmatprep.subr.mxu0 0.0
    %188 = vmatpush1.msra.mxu0 0.0
    %189 = vmatprep.subr.mxu0 0.0
    %190 = vmatpush1.msra.mxu0 0.0
    %191 = vmatprep.subr.mxu0 0.0
    %192 = vmatpush1.msra.mxu0 0.0
    %193 = vmatprep.subr.mxu0 0.0
    %194 = vmatpush1.msra.mxu0 0.0
    %195 = vmatprep.subr.mxu0 0.0
    %196 = vmatpush1.msra.mxu0 0.0
    %197 = vmatprep.subr.mxu0 0.0
    %198 = vmatpush1.msra.mxu0 0.0
    %199 = vmatprep.subr.mxu0 0.0
    %200 = vmatpush1.msra.mxu0 0.0
    %201 = vmatprep.subr.mxu0 0.0
    %202 = vmatpush1.msra.mxu0 0.0
    %203 = vmatprep.subr.mxu0 0.0
    %204 = vmatpush1.msra.mxu0 0.0
    %205 = vmatprep.subr.mxu0 0.0
    %206 = vmatpush1.msra.mxu0 0.0
    %207 = vmatprep.subr.mxu0 0.0
    %208 = vmatpush1.msra.mxu0 0.0
    %209 = vmatprep.subr.mxu0 0.0
    %210 = vmatpush1.msra.mxu0 0.0
    %211 = vmatprep.subr.mxu0 0.0
    %212 = vmatpush1.msra.mxu0 0.0
    %213 = vmatprep.mubr.f32.mxu0 0.0
    %214 = vmatmul.mubr.f32.gmra.mrb[0].mxu0 %v123
    %v215 = vpop.f32.mrb[0].mxu0
    %v216 = vadd.f32 %v147, %v215
    %v217 = vpop.f32.mrb[0].mxu0
    %218 = vdwg.mxu0
    %v219 = vmul.f32 %v216, 0.5
    %v220 = vmul.f32 %v216, %v116
    %v221 = verf.f32.pop %v220
    %v222 = vadd.f32 %v221, 1.0
    %v223 = vmul.f32 %v219, %v222
    %224 = vst [vmem:[#allocation2 + $0x8] sm:$0xff] %v223
    %v225 = vld [vmem:[#allocation2] sm:$0xff]
    %v226 = vld [vmem:[#allocation2 + $0x8] sm:$0xff]
    %v227 = vld [vmem:[%s3] sm:$0xff]
    %v228 = vld [vmem:[%s3 + $0x8] sm:$0xff]
    %v229 = vld [vmem:[%s3 + $0x10] sm:$0xff]
    %v230 = vld [vmem:[%s3 + $0x18] sm:$0xff]
    %v231 = vld [vmem:[%s3 + $0x20] sm:$0xff]
    %v232 = vld [vmem:[%s3 + $0x28] sm:$0xff]
    %v233 = vld [vmem:[%s3 + $0x30] sm:$0xff]
    %v234 = vld [vmem:[%s3 + $0x38] sm:$0xff]
    %v235 = vld [vmem:[%s3 + $0x40] sm:$0xff]
    %v236 = vld [vmem:[%s3 + $0x48] sm:$0xff]
    %v237 = vld [vmem:[%s3 + $0x50] sm:$0xff]
    %v238 = vld [vmem:[%s3 + $0x58] sm:$0xff]
    %v239 = vld [vmem:[%s3 + $0x60] sm:$0xff]
    %v240 = vld [vmem:[%s3 + $0x68] sm:$0xff]
    %v241 = vld [vmem:[%s3 + $0x70] sm:$0xff]
    %v242 = vld [vmem:[%s3 + $0x78] sm:$0xff]
    %v243 = vld [vmem:[%s3 + $0x80] sm:$0xff]
    %v244 = vld [vmem:[%s3 + $0x88] sm:$0xff]
    %v245 = vld [vmem:[%s3 + $0x90] sm:$0xff]
    %v246 = vld [vmem:[%s3 + $0x98] sm:$0xff]
    %v247 = vld [vmem:[%s3 + $0xa0] sm:$0xff]
    %v248 = vld [vmem:[%s3 + $0xa8] sm:$0xff]
    %v249 = vld [vmem:[%s3 + $0xb0] sm:$0xff]
    %v250 = vld [vmem:[%s3 + $0xb8] sm:$0xff]
    %v251 = vld [vmem:[%s3 + $0xc0] sm:$0xff]
    %v252 = vld [vmem:[%s3 + $0xc8] sm:$0xff]
    %v253 = vld [vmem:[%s3 + $0xd0] sm:$0xff]
    %v254 = vld [vmem:[%s3 + $0xd8] sm:$0xff]
    %v255 = vld [vmem:[%s3 + $0xe0] sm:$0xff]
    %v256 = vld [vmem:[%s3 + $0xe8] sm:$0xff]
    %v257 = vld [vmem:[%s3 + $0xf0] sm:$0xff]
    %v258 = vld [vmem:[%s3 + $0xf8] sm:$0xff]
    %v259 = vld [vmem:[%s4] sm:$0x1]
    %v261 = vlaneseq
    %v262 = vshrl.u32 %v261, 7
    %v263 = vsub.s32 0, %v262
    %v264 = vrot.slane %v259, %v263
    %266 = vmatprep.subr.mxu0 0.0
    %267 = vmatpush1.msra.mxu0 %v227
    %268 = vmatprep.subr.mxu0 0.0
    %269 = vmatpush1.msra.mxu0 %v228
    %270 = vmatprep.subr.mxu0 0.0
    %271 = vmatpush1.msra.mxu0 %v229
    %272 = vmatprep.subr.mxu0 0.0
    %273 = vmatpush1.msra.mxu0 %v230
    %274 = vmatprep.subr.mxu0 0.0
    %275 = vmatpush1.msra.mxu0 %v231
    %276 = vmatprep.subr.mxu0 0.0
    %277 = vmatpush1.msra.mxu0 %v232
    %278 = vmatprep.subr.mxu0 0.0
    %279 = vmatpush1.msra.mxu0 %v233
    %280 = vmatprep.subr.mxu0 0.0
    %281 = vmatpush1.msra.mxu0 %v234
    %282 = vmatprep.subr.mxu0 0.0
    %283 = vmatpush1.msra.mxu0 %v235
    %284 = vmatprep.subr.mxu0 0.0
    %285 = vmatpush1.msra.mxu0 %v236
    %286 = vmatprep.subr.mxu0 0.0
    %287 = vmatpush1.msra.mxu0 %v237
    %288 = vmatprep.subr.mxu0 0.0
    %289 = vmatpush1.msra.mxu0 %v238
    %290 = vmatprep.subr.mxu0 0.0
    %291 = vmatpush1.msra.mxu0 %v239
    %292 = vmatprep.subr.mxu0 0.0
    %293 = vmatpush1.msra.mxu0 %v240
    %294 = vmatprep.subr.mxu0 0.0
    %295 = vmatpush1.msra.mxu0 %v241
    %296 = vmatprep.subr.mxu0 0.0
    %297 = vmatpush1.msra.mxu0 %v242
    %298 = vmatprep.subr.mxu0 0.0
    %299 = vmatpush1.msra.mxu0 %v243
    %300 = vmatprep.subr.mxu0 0.0
    %301 = vmatpush1.msra.mxu0 %v244
    %302 = vmatprep.subr.mxu0 0.0
    %303 = vmatpush1.msra.mxu0 %v245
    %304 = vmatprep.subr.mxu0 0.0
    %305 = vmatpush1.msra.mxu0 %v246
    %306 = vmatprep.subr.mxu0 0.0
    %307 = vmatpush1.msra.mxu0 %v247
    %308 = vmatprep.subr.mxu0 0.0
    %309 = vmatpush1.msra.mxu0 %v248
    %310 = vmatprep.subr.mxu0 0.0
    %311 = vmatpush1.msra.mxu0 %v249
    %312 = vmatprep.subr.mxu0 0.0
    %313 = vmatpush1.msra.mxu0 %v250
    %314 = vmatprep.subr.mxu0 0.0
    %315 = vmatpush1.msra.mxu0 %v251
    %316 = vmatprep.subr.mxu0 0.0
    %317 = vmatpush1.msra.mxu0 %v252
    %318 = vmatprep.subr.mxu0 0.0
    %319 = vmatpush1.msra.mxu0 %v253
    %320 = vmatprep.subr.mxu0 0.0
    %321 = vmatpush1.msra.mxu0 %v254
    %322 = vmatprep.subr.mxu0 0.0
    %323 = vmatpush1.msra.mxu0 %v255
    %324 = vmatprep.subr.mxu0 0.0
    %325 = vmatpush1.msra.mxu0 %v256
    %326 = vmatprep.subr.mxu0 0.0
    %327 = vmatpush1.msra.mxu0 %v257
    %328 = vmatprep.subr.mxu0 0.0
    %329 = vmatpush1.msra.mxu0 %v258
    %330 = vmatprep.mubr.f32.mxu0 %v226
    %331 = vmatmul.mubr.f32.gmra.mrb[0].mxu0 %v225
    %v332 = vpop.f32.mrb[0].mxu0
    %v333 = vadd.f32 %v264, %v332
    %v334 = vpop.f32.mrb[0].mxu0
    %335 = vdwg.mxu0
    %336 = vst [vmem:[#allocation3] sm:$0xff] %v333
    // Predicated region
    $region22: #{multiple_mlp_aligner.1} parent=1 // pred_check
      _
    $region23: #{multiple_mlp_aligner.1} parent=1 // pred_check_branch
      %338 = sbr.rel (0) target = $region25
    $region24: #{multiple_mlp_aligner.1} parent=1 // pred_region
      %s340 = ssub.s32 128, 128
      %341 = vsyncadd [#allocation4], %s340
      %s343 = sshll.u32 [#allocation3], 4
      %s344 = int_to_ptr.vmem [resolvable:$true] %s343
      %346 = dma.vmem_to_hbm [thread:$0]  %s344, 128, %s5, [#allocation4]
    $region25: #{multiple_mlp_aligner.1} parent=1 // pred_fallthru
      _
    // Predicated region
    $region26: #{multiple_mlp_aligner.1} parent=1 // pred_check
      _
    $region27: #{multiple_mlp_aligner.1} parent=1 // pred_check_branch
      %348 = sbr.rel (0) target = $region29
    $region28: #{multiple_mlp_aligner.1} parent=1 // pred_region
      %349 = dma.done [#allocation4], 128
    $region29: #{multiple_mlp_aligner.1} parent=1 // pred_fallthru
      _
    %350 = vsyncpa [#allocation4], 1

</llo_original>
